<compile_context>
chip_gen: v5e
topology: v5e:2x2
jax: 0.10.0
libtpu: 0.0.40
codegen_flags: <defaults>
</compile_context>

<pallas_src>
import math

import jax
import jax.numpy as jnp
from jax.experimental import pallas as pl
from jax.experimental.pallas import tpu as pltpu


# ---------------------------------------------------------------------------
# tiling helpers
# ---------------------------------------------------------------------------
_TARGET_TILE_BYTES = 2 * 1024 * 1024  # ~2 MiB per block: big enough to hit the
                                      # HBM roofline, small enough for v5e/v7x.


def _sublane_rows(itemsize: int) -> int:
    # packed sublane tile: 8 rows for 4-byte, 16 for 2-byte, 32 for 1-byte.
    return max(8, 32 // max(1, itemsize))


def _rows_cols(shape):
    """Flatten to a lane-dense 2-D slab (rows, cols); cols covers H*W for NCHW."""
    if len(shape) == 4:           # NCHW (PyTorch convention)
        n, c, h, w = shape
        return n * c, h * w
    if len(shape) == 1:
        return 1, shape[0]
    return math.prod(shape[:-1]), shape[-1]


def _pick_row_tile(rows: int, cols: int, itemsize: int) -> int:
    """Largest row tile that is sublane-aligned, divides rows and ~fits target."""
    sub = _sublane_rows(itemsize)
    if rows % sub != 0:
        return rows  # full-extent block (always legal), grid collapses to 1
    max_r = max(sub, (_TARGET_TILE_BYTES // max(1, cols * itemsize)) // sub * sub)
    tile = min(rows, max_r)
    while rows % tile != 0:       # terminates: tile == sub always divides rows
        tile -= sub
    return max(tile, sub)


def _vmem_limit(tile_r: int, cols: int, itemsize: int, n_streams: int) -> int:
    tile_bytes = tile_r * cols * itemsize
    need = n_streams * 2 * tile_bytes          # double-buffered streams
    # generous headroom, clamped to the smallest physical VMEM (v7x: 64 MiB/TC)
    return int(min(64 * 1024 * 1024, max(16 * 1024 * 1024, 2 * need)))


# ---------------------------------------------------------------------------
# Kernel 1 (set_mask only): tiled nonzero count -> (1,1) f32 accumulator.
# ---------------------------------------------------------------------------
def _count_nonzero_kernel(m_ref, cnt_ref):
    @pl.when(pl.program_id(0) == 0)
    def _():
        cnt_ref[...] = jnp.zeros_like(cnt_ref)

    cnt_ref[...] += jnp.sum((m_ref[...] != 0).astype(jnp.float32), keepdims=True)


def _count_nonzero(mask2d):
    rows, cols = mask2d.shape
    tile_r = _pick_row_tile(rows, cols, mask2d.dtype.itemsize)
    cnt = pl.pallas_call(
        _count_nonzero_kernel,
        out_shape=jax.ShapeDtypeStruct((1, 1), jnp.float32),
        grid=(rows // tile_r,),
        in_specs=[pl.BlockSpec((tile_r, cols), lambda i: (i, 0))],
        out_specs=pl.BlockSpec((1, 1), lambda i: (0, 0)),   # revisited accumulator
        compiler_params=pltpu.CompilerParams(
            dimension_semantics=("arbitrary",),
            vmem_limit_bytes=_vmem_limit(tile_r, cols, mask2d.dtype.itemsize, 1),
        ),
    )(mask2d)
    return cnt[0, 0]


# ---------------------------------------------------------------------------
# Kernel 2 (set_mask only): scaled_mask = (mask * scale) cast to compute dtype.
# scale is a (1,1) float32 scalar in SMEM (32-bit scalar memory, no bf16 there).
# ---------------------------------------------------------------------------
def _scale_mask_kernel(scale_ref, m_ref, o_ref):
    o_ref[...] = (m_ref[...].astype(jnp.float32) * scale_ref[0, 0]).astype(o_ref.dtype)


def _make_scaled_mask(mask2d, scale_f32, out_dtype):
    rows, cols = mask2d.shape
    tile_r = _pick_row_tile(rows, cols, max(mask2d.dtype.itemsize,
                                            jnp.dtype(out_dtype).itemsize))
    return pl.pallas_call(
        _scale_mask_kernel,
        out_shape=jax.ShapeDtypeStruct((rows, cols), out_dtype),
        grid=(rows // tile_r,),
        in_specs=[
            pl.BlockSpec(memory_space=pltpu.SMEM),            # f32 scale scalar
            pl.BlockSpec((tile_r, cols), lambda i: (i, 0)),   # mask row slab
        ],
        out_specs=pl.BlockSpec((tile_r, cols), lambda i: (i, 0)),
        compiler_params=pltpu.CompilerParams(
            dimension_semantics=("parallel",),
            vmem_limit_bytes=_vmem_limit(tile_r, cols, 4, 2),
        ),
    )(scale_f32.reshape(1, 1).astype(jnp.float32), mask2d)


# ---------------------------------------------------------------------------
# Kernel 3 (hot path): out = x * scaled_mask, row-tiled, lane-dense blocks.
# ---------------------------------------------------------------------------
def _apply_scaled_mask_kernel(x_ref, m_ref, o_ref):
    o_ref[...] = x_ref[...] * m_ref[...]


def _apply_scaled_mask(x, scaled_mask):
    shape = x.shape
    rows, cols = _rows_cols(shape)
    x2 = x.reshape(rows, cols)
    m2 = scaled_mask.reshape(rows, cols)
    tile_r = _pick_row_tile(rows, cols, x2.dtype.itemsize)
    out2 = pl.pallas_call(
        _apply_scaled_mask_kernel,
        out_shape=jax.ShapeDtypeStruct((rows, cols), x.dtype),
        grid=(rows // tile_r,),
        in_specs=[
            pl.BlockSpec((tile_r, cols), lambda i: (i, 0)),   # x row slab
            pl.BlockSpec((tile_r, cols), lambda i: (i, 0)),   # scaled mask slab
        ],
        out_specs=pl.BlockSpec((tile_r, cols), lambda i: (i, 0)),
        compiler_params=pltpu.CompilerParams(
            dimension_semantics=("parallel",),
            vmem_limit_bytes=_vmem_limit(tile_r, cols, x2.dtype.itemsize, 3),
        ),
    )(x2, m2)
    return out2.reshape(shape)


# ---------------------------------------------------------------------------
# Module wrapper (mirrors DropoutFinetuning)
# ---------------------------------------------------------------------------
class DropoutFinetuningPallas:
    def __init__(self, name: str):
        self.name = name
        self.mask = None
        self.activation_scaling = jnp.float32(1.0)
        self._scaled_mask = None          # mask * activation_scaling, pre-cast
        self.x_size = None

    def set_mask(self, mask, compute_dtype=jnp.float32):
        self.mask = mask
        if mask is None:
            self._scaled_mask = None
            self.activation_scaling = jnp.float32(1.0)
            return
        rows, cols = _rows_cols(mask.shape)
        m2 = mask.reshape(rows, cols)
        nz = _count_nonzero(m2)                     # counted on the ORIGINAL dtype
        numel = jnp.float32(mask.size)
        # matches PyTorch: scaling stays 1.0 when the mask is all-zero
        scale = jnp.where(nz == 0, jnp.float32(1.0), numel / nz)
        self.activation_scaling = scale
        self._scaled_mask = _make_scaled_mask(m2, scale, compute_dtype).reshape(mask.shape)

    def __call__(self, x):
        self.x_size = x.shape
        if self._scaled_mask is None:
            return x                                 # identity path
        sm = self._scaled_mask
        if sm.dtype != x.dtype:
            # one-time re-cast if forward dtype differs from set_mask assumption
            sm = sm.astype(x.dtype)
            self._scaled_mask = sm
        return _apply_scaled_mask(x, sm)


# Functional convenience wrapper (count + scale + apply in one shot).
def dropout_finetuning_forward(x, mask=None):
    mod = DropoutFinetuningPallas("dropout_ft")
    mod.set_mask(mask, compute_dtype=x.dtype)
    return mod(x)


if __name__ == "__main__":
    key = jax.random.PRNGKey(0)
    kx, km = jax.random.split(key)

    N, C, H, W = 2, 4, 16, 16
    x = jax.random.normal(kx, (N, C, H, W), dtype=jnp.float32)
    # deterministic binary dropout mask (what DropoutFinetuning.set_mask expects)
    mask = jax.random.bernoulli(km, p=0.5, shape=(N, C, H, W)).astype(jnp.float32)

    mod = DropoutFinetuningPallas("dropout_ft")
    mod.set_mask(mask)                        # one-time: count + scale + pre-mul
    out = jax.block_until_ready(mod(x))       # hot path: single elementwise kernel

    # reference check against the exact PyTorch semantics
    nz = jnp.sum(mask != 0).astype(jnp.float32)
    scale_ref = jnp.where(nz == 0, 1.0, mask.size / nz)
    ref = x * mask * scale_ref
    assert out.shape == x.shape and out.dtype == x.dtype
    assert jnp.allclose(out, ref, atol=1e-5, rtol=1e-5)
    assert jnp.allclose(jnp.float32(mod.activation_scaling), scale_ref, rtol=1e-6)

    # all-zero mask path: scaling must stay 1.0 (PyTorch typo'd branch)
    mod_zero = DropoutFinetuningPallas("dropout_zero")
    mod_zero.set_mask(jnp.zeros_like(mask))
    out_zero = jax.block_until_ready(mod_zero(x))
    assert jnp.allclose(out_zero, jnp.zeros_like(x))

    # identity path (mask is None)
    out_id = jax.block_until_ready(dropout_finetuning_forward(x, None))
    assert jnp.allclose(out_id, x)

    print("KERNEL_OK")
</pallas_src>

<mosaic_0001>
module attributes {stable_mosaic.version = 11 : i64} {
  func.func @_count_nonzero_kernel(%arg0: i32, %arg1: memref<8x256xf32, #tpu.memory_space<vmem>>, %arg2: memref<1x1xf32, #tpu.memory_space<vmem>>) attributes {dimension_semantics = [#tpu.dimension_semantics<arbitrary>], iteration_bounds = array<i64: 1>, scalar_prefetch = 0 : i64, scratch_operands = 0 : i64, tpu.core_type = #tpu.core_type<tc>, window_params = [{transform_indices = @transform_0, window_bounds = array<i64: 8, 256>}, {pipeline_mode = #tpu.pipeline_mode<synchronous>, transform_indices = @transform_1, window_bounds = array<i64: 1, 1>}]} {
    %c0_i32 = arith.constant 0 : i32
    %0 = arith.cmpi eq, %arg0, %c0_i32 : i32
    %1 = arith.extui %0 : i1 to i32
    %c0_i32_0 = arith.constant 0 : i32
    %2 = arith.cmpi ne, %1, %c0_i32_0 : i32
    scf.if %2 {
      %cst_7 = arith.constant 0.000000e+00 : f32
      %16 = vector.broadcast %cst_7 : f32 to vector<1x1xf32>
      %c0_8 = arith.constant 0 : index
      %c0_9 = arith.constant 0 : index
      %17 = vector.load %arg2[%c0_8, %c0_9] : memref<1x1xf32, #tpu.memory_space<vmem>>, vector<1x1xf32>
      tpu.vector_store %arg2[%c0_8, %c0_9], %16 {strides = array<i32>} : memref<1x1xf32, #tpu.memory_space<vmem>>, vector<1x1xf32>,
    } else {
    }
    %c0 = arith.constant 0 : index
    %c0_1 = arith.constant 0 : index
    %3 = vector.load %arg2[%c0, %c0_1] : memref<1x1xf32, #tpu.memory_space<vmem>>, vector<1x1xf32>
    %c0_2 = arith.constant 0 : index
    %c0_3 = arith.constant 0 : index
    %4 = vector.load %arg1[%c0_2, %c0_3] : memref<8x256xf32, #tpu.memory_space<vmem>>, vector<8x256xf32>
    %cst = arith.constant 0.000000e+00 : f32
    %5 = vector.broadcast %cst : f32 to vector<8x256xf32>
    %6 = arith.cmpf one, %4, %5 : vector<8x256xf32>
    %7 = arith.extui %6 : vector<8x256xi1> to vector<8x256xi32>
    %8 = arith.sitofp %7 : vector<8x256xi32> to vector<8x256xf32>
    %9 = vector.shape_cast %8 : vector<8x256xf32> to vector<1x8x256xf32>
    %cst_4 = arith.constant dense<0.000000e+00> : vector<1xf32>
    %10 = vector.multi_reduction <add>, %9, %cst_4 [1, 2] : vector<1x8x256xf32> to vector<1xf32>
    %11 = vector.shape_cast %10 : vector<1xf32> to vector<1x1x1xf32>
    %12 = vector.extract %11[0, 0, 0] : f32 from vector<1x1x1xf32>
    %13 = vector.broadcast %12 : f32 to vector<1x1xf32>
    %14 = arith.addf %3, %13 : vector<1x1xf32>
    %c0_5 = arith.constant 0 : index
    %c0_6 = arith.constant 0 : index
    %15 = vector.load %arg2[%c0_5, %c0_6] : memref<1x1xf32, #tpu.memory_space<vmem>>, vector<1x1xf32>
    tpu.vector_store %arg2[%c0_5, %c0_6], %14 {strides = array<i32>} : memref<1x1xf32, #tpu.memory_space<vmem>>, vector<1x1xf32>,
    return
  }
  func.func @transform_0(%arg0: i32) -> (i32, i32) {
    %c0_i32 = arith.constant 0 : i32
    %c0_i32_0 = arith.constant 0 : i32
    return %arg0, %c0_i32 : i32, i32
  }
  func.func @transform_1(%arg0: i32) -> (i32, i32) {
    %c0_i32 = arith.constant 0 : i32
    %c0_i32_0 = arith.constant 0 : i32
    %c0_i32_1 = arith.constant 0 : i32
    return %c0_i32, %c0_i32_0 : i32, i32
  }
}

</mosaic_0001>

<llo_original>
// kernel: tpu_custom_call.1
$region0: #{tpu_custom_call.1}
  #allocation0 [shape = 'u32[]', space=smem, size = 0x4, offset = 0x4, fixed_abs, tag = 'smem constant byte address 0x4 - core index']
  #allocation1 [shape = 'u32[72,128]{1,0:T(1,128)}', space=vmem, size = 0x9000, scoped, tag = 'internal scratch']
  %s0 = inlined_call_operand.hbm [shape: f32[8,256], index: 0, kind: input, shape index: {}]
  %s1 = inlined_call_operand.hbm [shape: f32[1,1], index: 1, kind: output, shape index: {}]
  %s2 = sld [smem:[#allocation0]]
  $region22: #{tpu_custom_call.1} parent=0
    _
  %s4 = ssub.s32 1, %s2
  %s5 = scalar_select 0, %s4, %s2
  $region1: #{tpu_custom_call.1} parent=0
    #allocation2 [shape = 'u8[8192]{0}', space=vmem, size = 0x2000, scoped, tag = 'input window, operand 0, single buffered']
    #allocation3 [shape = 's32[1]{0}', space=sflag, size = 0x4, scoped, tag = 'scoped memory for tpu_custom_call.1']
    #allocation4 [shape = 's32[1]{0}', space=sflag, size = 0x4, scoped, tag = 'scoped memory for tpu_custom_call.1']
    #allocation5 [shape = 'u8[512]{0}', space=vmem, size = 0x400, scoped, tag = 'output window, operand 0, single buffered']
    %6 = vsyncpa [#allocation3], 0
    %7 = vsyncpa [#allocation4], 0
    // Predicated region
    $region2: #{tpu_custom_call.1} parent=1 // pred_check
      _
    $region3: #{tpu_custom_call.1} parent=1 // pred_check_branch
      %9 = sbr.rel (0) target = $region5
    $region4: #{tpu_custom_call.1} parent=1 // pred_region
      %11 = vsyncadd [#allocation3], 0
      %s13 = sshll.u32 %s0, 4
      %s14 = int_to_ptr.hbm [resolvable:$true] %s13
      %s15 = sshll.u32 [#allocation2], 4
      %s16 = int_to_ptr.vmem [resolvable:$true] %s15
      %18 = dma.hbm_to_vmem [thread:$0]  %s14, 256, %s16, [#allocation3]
    $region5: #{tpu_custom_call.1} parent=1 // pred_fallthru
      _
    // Predicated region
    $region6: #{tpu_custom_call.1} parent=1 // pred_check
      _
    $region7: #{tpu_custom_call.1} parent=1 // pred_check_branch
      %20 = sbr.rel (0) target = $region9
    $region8: #{tpu_custom_call.1} parent=1 // pred_region
      %22 = dma.done [#allocation3], 256
    $region9: #{tpu_custom_call.1} parent=1 // pred_fallthru
      _
    %p23 = scmp.eq.s32.totalorder 0, 0
    // Predicated region
    $region10: #{tpu_custom_call.1} parent=1 // pred_check
      %p24 = pneg %p23
    $region11: #{tpu_custom_call.1} parent=1 // pred_check_branch
      %26 = sbr.rel (%p24) target = $region13
    $region12: #{tpu_custom_call.1} parent=1 // pred_region
      %vm27 = vcmask 0
      %28 = vst.msk [vmem:[#allocation5] sm:$0x1] %vm27, 0.0
    $region13: #{tpu_custom_call.1} parent=1 // pred_fallthru
      _
    %v29 = vld [vmem:[#allocation5] sm:$0x1]
    %v30 = vld [vmem:[#allocation2] sm:$0xff]
    %v31 = vld [vmem:[#allocation2 + $0x8] sm:$0xff]
    %vm32 = vcmp.ne.f32.partialorder %v30, 0.0
    %vm33 = vcmp.ne.f32.partialorder %v31, 0.0
    %v34 = vsel %vm32, 1, 0
    %v35 = vsel %vm33, 1, 0
    %v36 = vcvt.s32.f32 %v34
    %v37 = vcvt.s32.f32 %v35
    %v38 = vadd.f32 %v36, %v37
    %39 = vadd.xlane.f32.xlu0 %v38
    %v40 = vpop.xlane.xlu0 %39
    %v41 = vrot.slane %v40, 4
    %v42 = vadd.f32 %v40, %v41
    %v43 = vrot.slane %v42, 2
    %v44 = vadd.f32 %v42, %v43
    %v45 = vrot.slane %v44, 1
    %v46 = vadd.f32 %v44, %v45
    %s47 = vtos %v46
    %v48 = vstv %s47
    %v49 = vadd.f32 %v29, %v48
    %vm50 = vcmask 0
    %51 = vst.msk [vmem:[#allocation5] sm:$0x1] %vm50, %v49
    // Predicated region
    $region14: #{tpu_custom_call.1} parent=1 // pred_check
      _
    $region15: #{tpu_custom_call.1} parent=1 // pred_check_branch
      %53 = sbr.rel (0) target = $region17
    $region16: #{tpu_custom_call.1} parent=1 // pred_region
      %55 = vsyncadd [#allocation4], 0
      %s57 = sshll.u32 [#allocation5], 4
      %s58 = int_to_ptr.vmem [resolvable:$true] %s57
      %s59 = sshll.u32 %s1, 4
      %s60 = int_to_ptr.hbm [resolvable:$true] %s59
      %62 = dma.vmem_to_hbm [thread:$0]  %s58, 16, %s60, [#allocation4]
    $region17: #{tpu_custom_call.1} parent=1 // pred_fallthru
      _
    // Predicated region
    $region18: #{tpu_custom_call.1} parent=1 // pred_check
      _
    $region19: #{tpu_custom_call.1} parent=1 // pred_check_branch
      %64 = sbr.rel (0) target = $region21
    $region20: #{tpu_custom_call.1} parent=1 // pred_region
      %66 = dma.done [#allocation4], 16
    $region21: #{tpu_custom_call.1} parent=1 // pred_fallthru
      _
    %67 = vsyncpa [#allocation3], 1
    %68 = vsyncpa [#allocation4], 1

</llo_original>
